<compile_context>
chip_gen: v6e
topology: v6e:2x2x1
jax: 0.10.0
libtpu: 0.0.40
codegen_flags: <defaults>
</compile_context>

<pallas_src>
import functools

import jax
import jax.numpy as jnp
from jax import lax
from jax.experimental import pallas as pl
from jax.experimental.pallas import tpu as pltpu

_MIB = 1 << 20


def _round_up(n, m):
    return ((n + m - 1) // m) * m


def _cdiv(a, b):
    return (a + b - 1) // b


def _vmem_capacity_bytes():
    try:
        return int(pltpu.get_tpu_info().vmem_capacity_bytes)
    except Exception:
        return 64 * _MIB  # v7x has the smallest VMEM per TensorCore.


def _mask_mean_kernel(masked_flag, h_chunk, x_ref, f_ref, o_ref):
    # x_ref: (TB, H, TE) native dtype   (H on sublanes, TE on lanes)
    # f_ref: (TB, H)     int32          (dense tile)
    # o_ref: (TB, TE)    float32        (lane-dense store)
    TB, H, TE = x_ref.shape

    if h_chunk >= H:
        # Small tile: single fused upcast + reduce.
        total = jnp.sum(x_ref[...].astype(jnp.float32), axis=1)
    else:
        # Large tile: chunked accumulation along H bounds live f32 vregs and
        # overlaps vld with VPU adds (stays DMA-bound, not spill-bound).
        n_full = H // h_chunk
        rem = H - n_full * h_chunk

        def _add(start, size, acc):
            xs = x_ref[:, pl.ds(start, size), :].astype(jnp.float32)
            return acc + jnp.sum(xs, axis=1)

        def body(c, acc):
            start = pl.multiple_of(c * h_chunk, h_chunk)
            return _add(start, h_chunk, acc)

        total = lax.fori_loop(0, n_full, body,
                              jnp.zeros((TB, TE), jnp.float32),
                              unroll=(n_full <= 8))
        if rem > 0:
            total = _add(n_full * h_chunk, rem, total)

    valid = (f_ref[...] != masked_flag).astype(jnp.float32)   # (TB, H)
    cnt = jnp.sum(valid, axis=1, keepdims=True)                # (TB, 1)

    # Exact division (torch parity); the kernel is HBM-bandwidth bound so an
    # approx EUP reciprocal would not change wall time.
    o_ref[...] = (total / cnt).astype(o_ref.dtype)


def mask_mean(x, flags, masked_flag, *, h_chunk=None):
    """Pallas implementation of MaskMean.forward.

    x:     (B, H, E) float (any float dtype; DMA'd as-is, accumulated in f32)
    flags: (B, H)    int-like
    returns (B, E) float32 == x.sum(1) / (flags != masked_flag).sum(1, keepdim)
    """
    B, H, E = x.shape
    assert flags.shape == (B, H), (flags.shape, (B, H))

    x_item = jnp.dtype(x.dtype).itemsize
    f_i32 = flags.astype(jnp.int32)

    # ---- tile sizing from the per-generation VMEM budget --------------------
    phys_vmem = _vmem_capacity_bytes()
    budget = int(phys_vmem * 0.55)  # double-buffered pipeline working set

    def tile_bytes(tb_, te_):
        # x + flags + out tiles, each double-buffered by the pipeline.
        return 2 * tb_ * (H * te_ * x_item + H * 4 + te_ * 4)

    # Split E (multiples of 128) only if even an 8-row tile overflows budget.
    te = E
    if E > 128 and tile_bytes(8, E) > budget:
        te_max = (budget // 16 - 4 * H) // (H * x_item + 4)
        te = max(128, min(E, (te_max // 128) * 128))
    # TODO(synk): if H alone is so large that an (8, H, 128) tile still does
    # not fit VMEM, an innermost 'arbitrary' H grid axis with an accumulator
    # scratch would be needed; not implemented here.

    row_bytes = tile_bytes(1, te)
    tb = max(8, (budget // row_bytes) // 8 * 8)
    tb = min(tb, _round_up(B, 8))

    # Prefer >= 4 parallel grid steps (feeds both v7x TensorCores, keeps the
    # DMA pipeline busy) as long as each step still moves >= ~2 MiB of x.
    n_e = _cdiv(E, te)
    if _cdiv(B, tb) * n_e < 4:
        min_rows = max(8, _round_up(_cdiv(2 * _MIB, max(1, H * te * x_item)), 8))
        need_b_steps = _cdiv(4, n_e)
        cand = max(max(8, _round_up(_cdiv(B, need_b_steps), 8)), min_rows)
        if cand < tb:
            tb = cand

    # In-kernel H-accumulation chunk: whole tile if its f32 image is small,
    # otherwise ~2 MiB f32 chunks, aligned to the native-dtype sublane tiling.
    h_align = 8 * max(1, 4 // x_item)
    if h_chunk is None:
        if tb * H * te * 4 <= 4 * _MIB:
            h_chunk = H
        else:
            h_chunk = ((2 * _MIB) // max(1, tb * te * 4)) // h_align * h_align
            h_chunk = min(H, max(h_align, h_chunk))
    else:
        h_chunk = max(1, min(int(h_chunk), H))
        if h_chunk < H:
            h_chunk = max(h_align, (h_chunk // h_align) * h_align)

    workset = tile_bytes(tb, te)
    vmem_limit = int(min(max(int(workset * 1.4), 32 * _MIB),
                         min(int(phys_vmem * 0.8), 96 * _MIB)))

    kernel = functools.partial(_mask_mean_kernel, int(masked_flag), int(h_chunk))

    out = pl.pallas_call(
        kernel,
        out_shape=jax.ShapeDtypeStruct((B, E), jnp.float32),
        grid=(_cdiv(B, tb), n_e),
        in_specs=[
            pl.BlockSpec((tb, H, te), lambda i, j: (i, 0, j)),   # x tile, native dtype
            pl.BlockSpec((tb, H), lambda i, j: (i, 0)),          # flags tile (reused across j)
        ],
        out_specs=pl.BlockSpec((tb, te), lambda i, j: (i, j)),   # lane-dense output
        compiler_params=pltpu.CompilerParams(
            dimension_semantics=("parallel", "parallel"),        # megacore / v7x 2 TCs
            vmem_limit_bytes=vmem_limit),
    )(x, f_i32)
    return out


def _reference(x, flags, masked_flag):
    """Pure-JAX reference matching the PyTorch MaskMean.forward."""
    mask = (flags != masked_flag).astype(jnp.float32)
    return jnp.sum(x.astype(jnp.float32), axis=1) / jnp.sum(mask, axis=1, keepdims=True)


if __name__ == "__main__":
    MASKED_FLAG = 0

    root = jax.random.PRNGKey(0)
    k1, k2, k3, k4, k5, k6 = jax.random.split(root, 6)

    # 1) Small shapes consistent with the module: batch=2, history=8, hidden=32.
    B, H, E = 2, 8, 32
    x = jax.random.normal(k1, (B, H, E), jnp.float32)
    flags = jax.random.randint(k2, (B, H), 0, 4, jnp.int32)
    flags = flags.at[:, 0].set(1)            # guarantee >= 1 valid position per row
    out = mask_mean(x, flags, MASKED_FLAG)
    jax.block_until_ready(out)
    ref = _reference(x, flags, MASKED_FLAG)
    assert out.shape == (B, E)
    assert jnp.allclose(out, ref, rtol=1e-5, atol=1e-5)

    # 2) Non-multiple batch + native bf16 input (partial last block, no pad,
    #    no wrapper f32 copy of x).
    B2, H2, E2 = 37, 16, 128
    x2 = jax.random.normal(k3, (B2, H2, E2), jnp.float32).astype(jnp.bfloat16)
    flags2 = jax.random.randint(k4, (B2, H2), 0, 3, jnp.int32)
    flags2 = flags2.at[:, 0].set(2)
    out2 = mask_mean(x2, flags2, MASKED_FLAG)
    jax.block_until_ready(out2)
    ref2 = _reference(x2, flags2, MASKED_FLAG)
    assert out2.shape == (B2, E2)
    assert jnp.allclose(out2, ref2, rtol=1e-4, atol=1e-4)

    # 3) Force the chunked H-accumulation path (full chunks + remainder).
    B3, H3, E3 = 16, 40, 128
    x3 = jax.random.normal(k5, (B3, H3, E3), jnp.float32)
    flags3 = jax.random.randint(k6, (B3, H3), 0, 3, jnp.int32)
    flags3 = flags3.at[:, 0].set(1)
    out3 = mask_mean(x3, flags3, MASKED_FLAG, h_chunk=16)
    jax.block_until_ready(out3)
    ref3 = _reference(x3, flags3, MASKED_FLAG)
    assert out3.shape == (B3, E3)
    assert jnp.allclose(out3, ref3, rtol=1e-5, atol=1e-5)

    print("KERNEL_OK")
</pallas_src>

<mosaic_0001>
module attributes {stable_mosaic.version = 11 : i64} {
  func.func @_mask_mean_kernel(%arg0: i32, %arg1: i32, %arg2: memref<8x8x32xf32, #tpu.memory_space<vmem>>, %arg3: memref<8x8xi32, #tpu.memory_space<vmem>>, %arg4: memref<8x32xf32, #tpu.memory_space<vmem>>) attributes {dimension_semantics = [#tpu.dimension_semantics<parallel>, #tpu.dimension_semantics<parallel>], iteration_bounds = array<i64: 1, 1>, scalar_prefetch = 0 : i64, scratch_operands = 0 : i64, tpu.core_type = #tpu.core_type<tc>, window_params = [{transform_indices = @transform_0, window_bounds = array<i64: 8, 8, 32>}, {transform_indices = @transform_1, window_bounds = array<i64: 8, 8>}, {transform_indices = @transform_2, window_bounds = array<i64: 8, 32>}]} {
    %c0 = arith.constant 0 : index
    %c0_0 = arith.constant 0 : index
    %c0_1 = arith.constant 0 : index
    %0 = vector.load %arg2[%c0, %c0_0, %c0_1] : memref<8x8x32xf32, #tpu.memory_space<vmem>>, vector<8x8x32xf32>
    %cst = arith.constant dense<0.000000e+00> : vector<8x32xf32>
    %1 = vector.multi_reduction <add>, %0, %cst [1] : vector<8x8x32xf32> to vector<8x32xf32>
    %c0_2 = arith.constant 0 : index
    %c0_3 = arith.constant 0 : index
    %2 = vector.load %arg3[%c0_2, %c0_3] : memref<8x8xi32, #tpu.memory_space<vmem>>, vector<8x8xi32>
    %c0_i32 = arith.constant 0 : i32
    %3 = vector.broadcast %c0_i32 : i32 to vector<8x8xi32>
    %4 = arith.cmpi ne, %2, %3 : vector<8x8xi32>
    %5 = arith.extui %4 : vector<8x8xi1> to vector<8x8xi32>
    %6 = arith.sitofp %5 : vector<8x8xi32> to vector<8x8xf32>
    %cst_4 = arith.constant dense<0.000000e+00> : vector<8xf32>
    %7 = vector.multi_reduction <add>, %6, %cst_4 [1] : vector<8x8xf32> to vector<8xf32>
    %8 = vector.shape_cast %7 : vector<8xf32> to vector<8x1xf32>
    %9 = vector.broadcast %8 : vector<8x1xf32> to vector<8x32xf32>
    %10 = arith.divf %1, %9 : vector<8x32xf32>
    %c0_5 = arith.constant 0 : index
    %c0_6 = arith.constant 0 : index
    %11 = vector.load %arg4[%c0_5, %c0_6] : memref<8x32xf32, #tpu.memory_space<vmem>>, vector<8x32xf32>
    tpu.vector_store %arg4[%c0_5, %c0_6], %10 {strides = array<i32>} : memref<8x32xf32, #tpu.memory_space<vmem>>, vector<8x32xf32>,
    return
  }
  func.func @transform_0(%arg0: i32, %arg1: i32) -> (i32, i32, i32) {
    %c0_i32 = arith.constant 0 : i32
    %c0_i32_0 = arith.constant 0 : i32
    return %arg0, %c0_i32, %arg1 : i32, i32, i32
  }
  func.func @transform_1(%arg0: i32, %arg1: i32) -> (i32, i32) {
    %c0_i32 = arith.constant 0 : i32
    %c0_i32_0 = arith.constant 0 : i32
    return %arg0, %c0_i32 : i32, i32
  }
  func.func @transform_2(%arg0: i32, %arg1: i32) -> (i32, i32) {
    %c0_i32 = arith.constant 0 : i32
    return %arg0, %arg1 : i32, i32
  }
}

</mosaic_0001>

<llo_original>
// kernel: tpu_custom_call.1
$region0: #{tpu_custom_call.1}
  #allocation0 [shape = 'u32[]', space=smem, size = 0x4, offset = 0x4, fixed_abs, tag = 'smem constant byte address 0x4 - core index']
  #allocation1 [shape = 'u32[144,128]{1,0:T(1,128)}', space=vmem, size = 0x12000, scoped, tag = 'internal scratch']
  %s0 = inlined_call_operand.hbm [shape: f32[2,8,32], index: 0, kind: input, shape index: {}]
  %s1 = inlined_call_operand.hbm [shape: s32[2,8], index: 1, kind: input, shape index: {}]
  %s2 = inlined_call_operand.hbm [shape: f32[2,32], index: 2, kind: output, shape index: {}]
  %s3 = sld [smem:[#allocation0]]
  $region26: #{tpu_custom_call.1} parent=0
    _
  %s5 = ssub.s32 1, %s3
  %s6 = scalar_select 0, %s5, %s3
  $region1: #{tpu_custom_call.1} parent=0
    #allocation2 [shape = 'u8[32768]{0}', space=vmem, size = 0x8000, scoped, tag = 'input window, operand 0, single buffered']
    #allocation3 [shape = 's32[1]{0}', space=sflag, size = 0x4, scoped, tag = 'scoped memory for tpu_custom_call.1']
    #allocation4 [shape = 's32[1]{0}', space=sflag, size = 0x4, scoped, tag = 'scoped memory for tpu_custom_call.1']
    #allocation5 [shape = 'u8[4096]{0}', space=vmem, size = 0x1000, scoped, tag = 'input window, operand 1, single buffered']
    #allocation6 [shape = 's32[1]{0}', space=sflag, size = 0x4, scoped, tag = 'scoped memory for tpu_custom_call.1']
    #allocation7 [shape = 'u8[4096]{0}', space=vmem, size = 0x1000, scoped, tag = 'output window, operand 0, single buffered']
    %7 = vsyncpa [#allocation3], 0
    %8 = vsyncpa [#allocation6], 0
    %9 = vsyncpa [#allocation4], 0
    // Predicated region
    $region2: #{tpu_custom_call.1} parent=1 // pred_check
      _
    $region3: #{tpu_custom_call.1} parent=1 // pred_check_branch
      %11 = sbr.rel (0) target = $region5
    $region4: #{tpu_custom_call.1} parent=1 // pred_region
      %s13 = ssub.s32 1024, 256
      %14 = vsyncadd [#allocation3], %s13
      %s15 = sshll.u32 [#allocation2], 4
      %s16 = int_to_ptr.vmem [resolvable:$true] %s15
      %21 = dma.hbm_to_vmem [thread:$0]  %s0, 256, %s16, [#allocation3], 128, 128, 8
    $region5: #{tpu_custom_call.1} parent=1 // pred_fallthru
      _
    // Predicated region
    $region6: #{tpu_custom_call.1} parent=1 // pred_check
      _
    $region7: #{tpu_custom_call.1} parent=1 // pred_check_branch
      %23 = sbr.rel (0) target = $region9
    $region8: #{tpu_custom_call.1} parent=1 // pred_region
      %s25 = ssub.s32 128, 32
      %26 = vsyncadd [#allocation6], %s25
      %s27 = sshll.u32 [#allocation5], 4
      %s28 = int_to_ptr.vmem [resolvable:$true] %s27
      %33 = dma.hbm_to_vmem [thread:$0]  %s1, 32, %s28, [#allocation6], 32, 32, 2
    $region9: #{tpu_custom_call.1} parent=1 // pred_fallthru
      _
    // Predicated region
    $region10: #{tpu_custom_call.1} parent=1 // pred_check
      _
    $region11: #{tpu_custom_call.1} parent=1 // pred_check_branch
      %35 = sbr.rel (0) target = $region13
    $region12: #{tpu_custom_call.1} parent=1 // pred_region
      %36 = dma.done [#allocation3], 1024
    $region13: #{tpu_custom_call.1} parent=1 // pred_fallthru
      _
    // Predicated region
    $region14: #{tpu_custom_call.1} parent=1 // pred_check
      _
    $region15: #{tpu_custom_call.1} parent=1 // pred_check_branch
      %38 = sbr.rel (0) target = $region17
    $region16: #{tpu_custom_call.1} parent=1 // pred_region
      %39 = dma.done [#allocation6], 128
    $region17: #{tpu_custom_call.1} parent=1 // pred_fallthru
      _
    %v40 = vld [vmem:[#allocation2] sm:$0xff]
    %v41 = vld [vmem:[#allocation2 + $0x8] sm:$0xff]
    %v42 = vld [vmem:[#allocation2 + $0x10] sm:$0xff]
    %v43 = vld [vmem:[#allocation2 + $0x18] sm:$0xff]
    %v44 = vld [vmem:[#allocation2 + $0x20] sm:$0xff]
    %v45 = vld [vmem:[#allocation2 + $0x28] sm:$0xff]
    %v46 = vld [vmem:[#allocation2 + $0x30] sm:$0xff]
    %v47 = vld [vmem:[#allocation2 + $0x38] sm:$0xff]
    %vm48 = vcmask 261120
    %v49 = vsel %vm48, %v40, 0.0
    %v50 = vrot.slane %v49, 4
    %v51 = vadd.f32 %v49, %v50
    %v52 = vrot.slane %v51, 2
    %v53 = vadd.f32 %v51, %v52
    %v54 = vrot.slane %v53, 1
    %v55 = vadd.f32 %v53, %v54
    %v56 = vsel %vm48, %v41, 0.0
    %v57 = vrot.slane %v56, 4
    %v58 = vadd.f32 %v56, %v57
    %v59 = vrot.slane %v58, 2
    %v60 = vadd.f32 %v58, %v59
    %v61 = vrot.slane %v60, 1
    %v62 = vadd.f32 %v60, %v61
    %v63 = vsel %vm48, %v42, 0.0
    %v64 = vrot.slane %v63, 4
    %v65 = vadd.f32 %v63, %v64
    %v66 = vrot.slane %v65, 2
    %v67 = vadd.f32 %v65, %v66
    %v68 = vrot.slane %v67, 1
    %v69 = vadd.f32 %v67, %v68
    %v70 = vsel %vm48, %v43, 0.0
    %v71 = vrot.slane %v70, 4
    %v72 = vadd.f32 %v70, %v71
    %v73 = vrot.slane %v72, 2
    %v74 = vadd.f32 %v72, %v73
    %v75 = vrot.slane %v74, 1
    %v76 = vadd.f32 %v74, %v75
    %v77 = vsel %vm48, %v44, 0.0
    %v78 = vrot.slane %v77, 4
    %v79 = vadd.f32 %v77, %v78
    %v80 = vrot.slane %v79, 2
    %v81 = vadd.f32 %v79, %v80
    %v82 = vrot.slane %v81, 1
    %v83 = vadd.f32 %v81, %v82
    %v84 = vsel %vm48, %v45, 0.0
    %v85 = vrot.slane %v84, 4
    %v86 = vadd.f32 %v84, %v85
    %v87 = vrot.slane %v86, 2
    %v88 = vadd.f32 %v86, %v87
    %v89 = vrot.slane %v88, 1
    %v90 = vadd.f32 %v88, %v89
    %v91 = vsel %vm48, %v46, 0.0
    %v92 = vrot.slane %v91, 4
    %v93 = vadd.f32 %v91, %v92
    %v94 = vrot.slane %v93, 2
    %v95 = vadd.f32 %v93, %v94
    %v96 = vrot.slane %v95, 1
    %v97 = vadd.f32 %v95, %v96
    %v98 = vsel %vm48, %v47, 0.0
    %v99 = vrot.slane %v98, 4
    %v100 = vadd.f32 %v98, %v99
    %v101 = vrot.slane %v100, 2
    %v102 = vadd.f32 %v100, %v101
    %v103 = vrot.slane %v102, 1
    %v104 = vadd.f32 %v102, %v103
    %v105 = vld [vmem:[#allocation5] sm:$0xff]
    %vm106 = vcmp.ne.s32.totalorder %v105, 0
    %v107 = vsel %vm106, 1, 0
    %v108 = vcvt.s32.f32 %v107
    %vm109 = vcmask 64512
    %v110 = vsel %vm109, %v108, 0.0
    %111 = vadd.xlane.f32.xlu0 %v110
    %v112 = vpop.xlane.xlu0 %111
    %v114 = vrot.slane %v112, 1
    %v115 = vrot.slane %v112, 2
    %v116 = vrot.slane %v112, 3
    %v117 = vrot.slane %v112, 4
    %v118 = vrot.slane %v112, 5
    %v119 = vrot.slane %v112, 6
    %v120 = vrot.slane %v112, 7
    %v129 = vrcp.pop %v112
    %v130 = vmul.f32 %v55, %v129
    %v131 = vrcp.pop %v114
    %v132 = vmul.f32 %v62, %v131
    %v133 = vrcp.pop %v115
    %v134 = vmul.f32 %v69, %v133
    %v135 = vrcp.pop %v116
    %v136 = vmul.f32 %v76, %v135
    %v137 = vrcp.pop %v117
    %v138 = vmul.f32 %v83, %v137
    %v139 = vrcp.pop %v118
    %v140 = vmul.f32 %v90, %v139
    %v141 = vrcp.pop %v119
    %v142 = vmul.f32 %v97, %v141
    %v143 = vrcp.pop %v120
    %v144 = vmul.f32 %v104, %v143
    %v153 = vrot.slane %v132, 7
    %vm154 = vcmask 1041409
    %v155 = vsel %vm154, %v153, %v130
    %v156 = vrot.slane %v134, 6
    %vm157 = vcmask 1042434
    %v158 = vsel %vm157, %v156, %v155
    %v159 = vrot.slane %v136, 5
    %vm160 = vcmask 1043459
    %v161 = vsel %vm160, %v159, %v158
    %v162 = vrot.slane %v138, 4
    %vm163 = vcmask 1044484
    %v164 = vsel %vm163, %v162, %v161
    %v165 = vrot.slane %v140, 3
    %vm166 = vcmask 1045509
    %v167 = vsel %vm166, %v165, %v164
    %v168 = vrot.slane %v142, 2
    %vm169 = vcmask 1046534
    %v170 = vsel %vm169, %v168, %v167
    %v171 = vrot.slane %v144, 1
    %vm172 = vcmask 1047559
    %v173 = vsel %vm172, %v171, %v170
    %175 = vst.msk [vmem:[#allocation7] sm:$0xff] %vm48, %v173
    // Predicated region
    $region18: #{tpu_custom_call.1} parent=1 // pred_check
      _
    $region19: #{tpu_custom_call.1} parent=1 // pred_check_branch
      %177 = sbr.rel (0) target = $region21
    $region20: #{tpu_custom_call.1} parent=1 // pred_region
      %s179 = ssub.s32 128, 32
      %180 = vsyncadd [#allocation4], %s179
      %s181 = sshll.u32 [#allocation7], 4
      %s182 = int_to_ptr.vmem [resolvable:$true] %s181
      %187 = dma.vmem_to_hbm [thread:$0]  %s182, 32, %s2, [#allocation4], 32, 32, 2
    $region21: #{tpu_custom_call.1} parent=1 // pred_fallthru
      _
    // Predicated region
    $region22: #{tpu_custom_call.1} parent=1 // pred_check
      _
    $region23: #{tpu_custom_call.1} parent=1 // pred_check_branch
      %189 = sbr.rel (0) target = $region25
    $region24: #{tpu_custom_call.1} parent=1 // pred_region
      %190 = dma.done [#allocation4], 128
    $region25: #{tpu_custom_call.1} parent=1 // pred_fallthru
      _
    %191 = vsyncpa [#allocation3], 1
    %192 = vsyncpa [#allocation6], 1
    %193 = vsyncpa [#allocation4], 1

</llo_original>
